<compile_context>
chip_gen: v7x
topology: tpu7x:2x2x1
jax: 0.10.0
libtpu: 0.0.40
codegen_flags: <defaults>
</compile_context>

<pallas_src>
import jax
import jax.numpy as jnp
from jax.experimental import pallas as pl
from jax.experimental.pallas import tpu as pltpu


def _l1_dist_kernel(a_ref, b_ref, o_ref):
    # Elementwise |a - b| over the whole VMEM tile.
    o_ref[...] = jnp.abs(a_ref[...] - b_ref[...])


_LANE = 128
# Packed sublane count per element size (f32 -> 8, bf16 -> 16, int8/fp8 -> 32).
_PACK = {4: 8, 2: 16, 1: 32}

# Below this many bytes per input array, skip Pallas (call overhead dominates).
_SMALL_BYTES = 256 * 1024
# Never shrink a tile below ~1 MiB per (array, buffer) just to add grid steps.
_TILE_FLOOR_BYTES = 1 << 20


def _chip_info():
    """Returns (num_tensorcores, vmem_limit_bytes, max_tile_bytes) for the
    local TPU generation. Conservative (v7x-safe) defaults when unknown."""
    kind = ""
    try:
        kind = jax.devices()[0].device_kind.lower()
    except Exception:  # pragma: no cover - no devices / CPU fallback
        pass
    if "v7" in kind or "7x" in kind:
        # v7x: 2 TCs/chip, 64 MiB physical / 32 MiB scoped VMEM per TC.
        return 2, 32 * 1024 * 1024, 4 * 1024 * 1024
    if "v5" in kind or "v6" in kind:
        # v5e/v5p/v6e: single-TC scheduling, 128 MiB physical VMEM.
        return 1, 64 * 1024 * 1024, 8 * 1024 * 1024
    # Unknown generation: be safe (tight VMEM, single TC assumption).
    return 1, 32 * 1024 * 1024, 4 * 1024 * 1024


def l1_dist(in_embedding: jax.Array, val_embedding: jax.Array) -> jax.Array:
    """Pallas equivalent of torch.abs(in_embedding - val_embedding)."""
    assert in_embedding.shape == val_embedding.shape
    assert in_embedding.dtype == val_embedding.dtype
    assert in_embedding.ndim == 2, "expected (batch_size, embedding_dim)"

    B, D = in_embedding.shape
    dtype = in_embedding.dtype
    itemsize = jnp.dtype(dtype).itemsize
    pack = _PACK.get(itemsize, 8)
    total = B * D

    # --- tiny inputs: a single fused XLA op beats pallas_call fixed cost ----
    if total * itemsize < _SMALL_BYTES:
        return jnp.abs(in_embedding - val_embedding)

    num_tc, vmem_limit, max_tile_bytes = _chip_info()

    # --- choose the lane-dense 2D slab presented to the kernel --------------
    # Elementwise op => layout is free. Keep the original (B, D) when D is
    # already a multiple of 128 and a pack of rows fits the tile budget;
    # otherwise flatten, pad up to a multiple of `width`, and re-slab.
    if D % _LANE == 0 and D * itemsize * pack <= max_tile_bytes:
        rows, width = B, D
        a, b = in_embedding, val_embedding
        pad = 0
        reslabbed = False
    else:
        width = None
        for cand in (2048, 1024, 512, 256, 128):
            if total % cand == 0 and cand * itemsize * pack <= max_tile_bytes:
                width = cand
                break
        if width is None:
            # No exact divisor: pad the flat stream (cost is negligible vs the
            # 3N bytes already moved; avoids masked vst.msk partial stores).
            width = 1024 if 1024 * itemsize * pack <= max_tile_bytes else _LANE
        rows = -(-total // width)  # ceil
        pad = rows * width - total
        a_flat = in_embedding.reshape(-1)
        b_flat = val_embedding.reshape(-1)
        if pad:
            a_flat = jnp.pad(a_flat, (0, pad))
            b_flat = jnp.pad(b_flat, (0, pad))
        a = a_flat.reshape(rows, width)
        b = b_flat.reshape(rows, width)
        reslabbed = True

    # --- size the row tile by VMEM bytes (pack-aligned, within budget) ------
    bytes_per_row = width * itemsize
    max_rows_budget = max(pack, (max_tile_bytes // bytes_per_row // pack) * pack)
    tb = min(rows, max_rows_budget)

    # --- multi-TC only: aim for >= 2 grid steps per TensorCore --------------
    # so each core keeps input-prefetch / output-writeback overlapped, but
    # never shrink below the ~1 MiB tile floor (roofline curve flattens there).
    if num_tc > 1:
        target_steps = 2 * num_tc
        if pl.cdiv(rows, tb) < target_steps:
            cand = -(-rows // target_steps)            # ceil(rows / target)
            cand = -(-cand // pack) * pack             # round up to pack
            floor_rows = -(-_TILE_FLOOR_BYTES // bytes_per_row)
            floor_rows = max(pack, -(-floor_rows // pack) * pack)
            if floor_rows <= cand < tb:
                tb = cand

    grid = (pl.cdiv(rows, tb),)
    spec = pl.BlockSpec((tb, width), lambda i: (i, 0))

    # "parallel" lets the runtime shard the row axis across TensorCores on
    # multi-TC chips. TODO(synk): verify via xprof that both v7x TCs stream;
    # if not, switch this axis to pltpu.CORE_PARALLEL.
    out = pl.pallas_call(
        _l1_dist_kernel,
        out_shape=jax.ShapeDtypeStruct((rows, width), dtype),
        grid_spec=pltpu.PrefetchScalarGridSpec(
            num_scalar_prefetch=0,
            grid=grid,
            in_specs=[spec, spec],
            out_specs=spec,
        ),
        compiler_params=pltpu.CompilerParams(
            dimension_semantics=("parallel",),
            vmem_limit_bytes=vmem_limit,
        ),
    )(a, b)

    if reslabbed:
        out = out.reshape(-1)
        if pad:
            out = out[:total]
        out = out.reshape(B, D)
    return out


if __name__ == "__main__":
    key = jax.random.PRNGKey(0)
    k1, k2, k3, k4, k5, k6 = jax.random.split(key, 6)

    # 1) Lane-aligned embedding_dim, big enough to take the Pallas path.
    B1, D1 = 512, 256
    a1 = jax.random.normal(k1, (B1, D1), dtype=jnp.float32)
    b1 = jax.random.normal(k2, (B1, D1), dtype=jnp.float32)
    o1 = jax.block_until_ready(l1_dist(a1, b1))
    r1 = jnp.abs(a1 - b1)
    assert o1.shape == r1.shape and o1.dtype == r1.dtype
    assert bool(jnp.array_equal(o1, r1))

    # 2) Non-lane-aligned embedding_dim -> pad + re-slab path (no masked stores).
    B2, D2 = 700, 199
    a2 = jax.random.normal(k3, (B2, D2), dtype=jnp.float32)
    b2 = jax.random.normal(k4, (B2, D2), dtype=jnp.float32)
    o2 = jax.block_until_ready(l1_dist(a2, b2))
    r2 = jnp.abs(a2 - b2)
    assert o2.shape == r2.shape and o2.dtype == r2.dtype
    assert bool(jnp.array_equal(o2, r2))

    # 3) Tiny (batch, embedding_dim) typical of the siamese head -> short-circuit.
    B3, D3 = 8, 128
    a3 = jax.random.normal(k5, (B3, D3), dtype=jnp.float32)
    b3 = jax.random.normal(k6, (B3, D3), dtype=jnp.float32)
    o3 = jax.block_until_ready(l1_dist(a3, b3))
    assert bool(jnp.array_equal(o3, jnp.abs(a3 - b3)))

    print("KERNEL_OK")
</pallas_src>

<mosaic_0001>
module attributes {stable_mosaic.version = 11 : i64} {
  func.func @_l1_dist_kernel(%arg0: i32, %arg1: memref<512x256xf32, #tpu.memory_space<vmem>>, %arg2: memref<512x256xf32, #tpu.memory_space<vmem>>, %arg3: memref<512x256xf32, #tpu.memory_space<vmem>>) attributes {dimension_semantics = [#tpu.dimension_semantics<parallel>], iteration_bounds = array<i64: 1>, scalar_prefetch = 0 : i64, scratch_operands = 0 : i64, tpu.core_type = #tpu.core_type<tc>, window_params = [{transform_indices = @transform_0, window_bounds = array<i64: 512, 256>}, {transform_indices = @transform_1, window_bounds = array<i64: 512, 256>}, {transform_indices = @transform_2, window_bounds = array<i64: 512, 256>}]} {
    %c0 = arith.constant 0 : index
    %c0_0 = arith.constant 0 : index
    %0 = vector.load %arg1[%c0, %c0_0] : memref<512x256xf32, #tpu.memory_space<vmem>>, vector<512x256xf32>
    %c0_1 = arith.constant 0 : index
    %c0_2 = arith.constant 0 : index
    %1 = vector.load %arg2[%c0_1, %c0_2] : memref<512x256xf32, #tpu.memory_space<vmem>>, vector<512x256xf32>
    %2 = arith.subf %0, %1 : vector<512x256xf32>
    %3 = math.absf %2 : vector<512x256xf32>
    %c0_3 = arith.constant 0 : index
    %c0_4 = arith.constant 0 : index
    %4 = vector.load %arg3[%c0_3, %c0_4] : memref<512x256xf32, #tpu.memory_space<vmem>>, vector<512x256xf32>
    tpu.vector_store %arg3[%c0_3, %c0_4], %3 {strides = array<i32>} : memref<512x256xf32, #tpu.memory_space<vmem>>, vector<512x256xf32>,
    return
  }
  func.func @transform_0(%arg0: i32) -> (i32, i32) {
    %c0_i32 = arith.constant 0 : i32
    %c0_i32_0 = arith.constant 0 : i32
    return %arg0, %c0_i32 : i32, i32
  }
  func.func @transform_1(%arg0: i32) -> (i32, i32) {
    %c0_i32 = arith.constant 0 : i32
    %c0_i32_0 = arith.constant 0 : i32
    return %arg0, %c0_i32 : i32, i32
  }
  func.func @transform_2(%arg0: i32) -> (i32, i32) {
    %c0_i32 = arith.constant 0 : i32
    %c0_i32_0 = arith.constant 0 : i32
    return %arg0, %c0_i32 : i32, i32
  }
}

</mosaic_0001>

<llo_original>
// kernel: tpu_custom_call.1
$region0: #{tpu_custom_call.1}
  #allocation0 [shape = 'u32[]', space=smem, size = 0x4, offset = 0x4, fixed_abs, tag = 'smem constant byte address 0x4 - core index']
  #allocation1 [shape = 'u32[144,128]{1,0:T(1,128)}', space=vmem, size = 0x12000, scoped, tag = 'internal scratch']
  %s0 = inlined_call_operand.hbm [shape: f32[512,256], index: 0, kind: input, shape index: {}]
  %s1 = inlined_call_operand.hbm [shape: f32[512,256], index: 1, kind: input, shape index: {}]
  %s2 = inlined_call_operand.hbm [shape: f32[512,256], index: 2, kind: output, shape index: {}]
  %s3 = sld [smem:[#allocation0]]
  $region26: #{tpu_custom_call.1} parent=0
    _
  %s5 = ssub.s32 1, %s3
  %s6 = scalar_select 0, %s5, %s3
  $region1: #{tpu_custom_call.1} parent=0
    #allocation2 [shape = 'u8[524288]{0}', space=vmem, size = 0x80000, scoped, tag = 'input window, operand 0, single buffered']
    #allocation3 [shape = 's32[1]{0}', space=sflag, size = 0x4, scoped, tag = 'scoped memory for tpu_custom_call.1']
    #allocation4 [shape = 's32[1]{0}', space=sflag, size = 0x4, scoped, tag = 'scoped memory for tpu_custom_call.1']
    #allocation5 [shape = 'u8[524288]{0}', space=vmem, size = 0x80000, scoped, tag = 'input window, operand 1, single buffered']
    #allocation6 [shape = 's32[1]{0}', space=sflag, size = 0x4, scoped, tag = 'scoped memory for tpu_custom_call.1']
    #allocation7 [shape = 'u8[524288]{0}', space=vmem, size = 0x80000, scoped, tag = 'output window, operand 0, single buffered']
    %7 = vsyncpa [#allocation3], 0
    %8 = vsyncpa [#allocation6], 0
    %9 = vsyncpa [#allocation4], 0
    // Predicated region
    $region2: #{tpu_custom_call.1} parent=1 // pred_check
      _
    $region3: #{tpu_custom_call.1} parent=1 // pred_check_branch
      %11 = sbr.rel (0) target = $region5
    $region4: #{tpu_custom_call.1} parent=1 // pred_region
      %s13 = ssub.s32 16384, 16384
      %14 = vsyncadd [#allocation3], %s13
      %s15 = sshll.u32 [#allocation2], 4
      %s16 = int_to_ptr.vmem [resolvable:$true] %s15
      %21 = dma.hbm_to_vmem [thread:$0]  %s0, 16384, %s16, [#allocation3], 256, 256, 16
    $region5: #{tpu_custom_call.1} parent=1 // pred_fallthru
      _
    // Predicated region
    $region6: #{tpu_custom_call.1} parent=1 // pred_check
      _
    $region7: #{tpu_custom_call.1} parent=1 // pred_check_branch
      %23 = sbr.rel (0) target = $region9
    $region8: #{tpu_custom_call.1} parent=1 // pred_region
      %s25 = ssub.s32 16384, 16384
      %26 = vsyncadd [#allocation6], %s25
      %s27 = sshll.u32 [#allocation5], 4
      %s28 = int_to_ptr.vmem [resolvable:$true] %s27
      %33 = dma.hbm_to_vmem [thread:$0]  %s1, 16384, %s28, [#allocation6], 256, 256, 16
    $region9: #{tpu_custom_call.1} parent=1 // pred_fallthru
      _
    // Predicated region
    $region10: #{tpu_custom_call.1} parent=1 // pred_check
      _
    $region11: #{tpu_custom_call.1} parent=1 // pred_check_branch
      %35 = sbr.rel (0) target = $region13
    $region12: #{tpu_custom_call.1} parent=1 // pred_region
      %36 = dma.done [#allocation3], 16384
    $region13: #{tpu_custom_call.1} parent=1 // pred_fallthru
      _
    // Predicated region
    $region14: #{tpu_custom_call.1} parent=1 // pred_check
      _
    $region15: #{tpu_custom_call.1} parent=1 // pred_check_branch
      %38 = sbr.rel (0) target = $region17
    $region16: #{tpu_custom_call.1} parent=1 // pred_region
      %39 = dma.done [#allocation6], 16384
    $region17: #{tpu_custom_call.1} parent=1 // pred_fallthru
      _
    %v40 = vld [vmem:[#allocation2] sm:$0xff]
    %v41 = vld [vmem:[#allocation2 + $0x8] sm:$0xff]
    %v42 = vld [vmem:[#allocation2 + $0x10] sm:$0xff]
    %v43 = vld [vmem:[#allocation2 + $0x18] sm:$0xff]
    %v44 = vld [vmem:[#allocation2 + $0x20] sm:$0xff]
    %v45 = vld [vmem:[#allocation2 + $0x28] sm:$0xff]
    %v46 = vld [vmem:[#allocation2 + $0x30] sm:$0xff]
    %v47 = vld [vmem:[#allocation2 + $0x38] sm:$0xff]
    %v48 = vld [vmem:[#allocation2 + $0x40] sm:$0xff]
    %v49 = vld [vmem:[#allocation2 + $0x48] sm:$0xff]
    %v50 = vld [vmem:[#allocation2 + $0x50] sm:$0xff]
    %v51 = vld [vmem:[#allocation2 + $0x58] sm:$0xff]
    %v52 = vld [vmem:[#allocation2 + $0x60] sm:$0xff]
    %v53 = vld [vmem:[#allocation2 + $0x68] sm:$0xff]
    %v54 = vld [vmem:[#allocation2 + $0x70] sm:$0xff]
    %v55 = vld [vmem:[#allocation2 + $0x78] sm:$0xff]
    %v56 = vld [vmem:[#allocation2 + $0x80] sm:$0xff]
    %v57 = vld [vmem:[#allocation2 + $0x88] sm:$0xff]
    %v58 = vld [vmem:[#allocation2 + $0x90] sm:$0xff]
    %v59 = vld [vmem:[#allocation2 + $0x98] sm:$0xff]
    %v60 = vld [vmem:[#allocation2 + $0xa0] sm:$0xff]
    %v61 = vld [vmem:[#allocation2 + $0xa8] sm:$0xff]
    %v62 = vld [vmem:[#allocation2 + $0xb0] sm:$0xff]
    %v63 = vld [vmem:[#allocation2 + $0xb8] sm:$0xff]
    %v64 = vld [vmem:[#allocation2 + $0xc0] sm:$0xff]
    %v65 = vld [vmem:[#allocation2 + $0xc8] sm:$0xff]
    %v66 = vld [vmem:[#allocation2 + $0xd0] sm:$0xff]
    %v67 = vld [vmem:[#allocation2 + $0xd8] sm:$0xff]
    %v68 = vld [vmem:[#allocation2 + $0xe0] sm:$0xff]
    %v69 = vld [vmem:[#allocation2 + $0xe8] sm:$0xff]
    %v70 = vld [vmem:[#allocation2 + $0xf0] sm:$0xff]
    %v71 = vld [vmem:[#allocation2 + $0xf8] sm:$0xff]
    %v72 = vld [vmem:[#allocation2 + $0x100] sm:$0xff]
    %v73 = vld [vmem:[#allocation2 + $0x108] sm:$0xff]
    %v74 = vld [vmem:[#allocation2 + $0x110] sm:$0xff]
    %v75 = vld [vmem:[#allocation2 + $0x118] sm:$0xff]
    %v76 = vld [vmem:[#allocation2 + $0x120] sm:$0xff]
    %v77 = vld [vmem:[#allocation2 + $0x128] sm:$0xff]
    %v78 = vld [vmem:[#allocation2 + $0x130] sm:$0xff]
    %v79 = vld [vmem:[#allocation2 + $0x138] sm:$0xff]
    %v80 = vld [vmem:[#allocation2 + $0x140] sm:$0xff]
    %v81 = vld [vmem:[#allocation2 + $0x148] sm:$0xff]
    %v82 = vld [vmem:[#allocation2 + $0x150] sm:$0xff]
    %v83 = vld [vmem:[#allocation2 + $0x158] sm:$0xff]
    %v84 = vld [vmem:[#allocation2 + $0x160] sm:$0xff]
    %v85 = vld [vmem:[#allocation2 + $0x168] sm:$0xff]
    %v86 = vld [vmem:[#allocation2 + $0x170] sm:$0xff]
    %v87 = vld [vmem:[#allocation2 + $0x178] sm:$0xff]
    %v88 = vld [vmem:[#allocation2 + $0x180] sm:$0xff]
    %v89 = vld [vmem:[#allocation2 + $0x188] sm:$0xff]
    %v90 = vld [vmem:[#allocation2 + $0x190] sm:$0xff]
    %v91 = vld [vmem:[#allocation2 + $0x198] sm:$0xff]
    %v92 = vld [vmem:[#allocation2 + $0x1a0] sm:$0xff]
    %v93 = vld [vmem:[#allocation2 + $0x1a8] sm:$0xff]
    %v94 = vld [vmem:[#allocation2 + $0x1b0] sm:$0xff]
    %v95 = vld [vmem:[#allocation2 + $0x1b8] sm:$0xff]
    %v96 = vld [vmem:[#allocation2 + $0x1c0] sm:$0xff]
    %v97 = vld [vmem:[#allocation2 + $0x1c8] sm:$0xff]
    %v98 = vld [vmem:[#allocation2 + $0x1d0] sm:$0xff]
    %v99 = vld [vmem:[#allocation2 + $0x1d8] sm:$0xff]
    %v100 = vld [vmem:[#allocation2 + $0x1e0] sm:$0xff]
    %v101 = vld [vmem:[#allocation2 + $0x1e8] sm:$0xff]
    %v102 = vld [vmem:[#allocation2 + $0x1f0] sm:$0xff]
    %v103 = vld [vmem:[#allocation2 + $0x1f8] sm:$0xff]
    %v104 = vld [vmem:[#allocation2 + $0x200] sm:$0xff]
    %v105 = vld [vmem:[#allocation2 + $0x208] sm:$0xff]
    %v106 = vld [vmem:[#allocation2 + $0x210] sm:$0xff]
    %v107 = vld [vmem:[#allocation2 + $0x218] sm:$0xff]
    %v108 = vld [vmem:[#allocation2 + $0x220] sm:$0xff]
    %v109 = vld [vmem:[#allocation2 + $0x228] sm:$0xff]
    %v110 = vld [vmem:[#allocation2 + $0x230] sm:$0xff]
    %v111 = vld [vmem:[#allocation2 + $0x238] sm:$0xff]
    %v112 = vld [vmem:[#allocation2 + $0x240] sm:$0xff]
    %v113 = vld [vmem:[#allocation2 + $0x248] sm:$0xff]
    %v114 = vld [vmem:[#allocation2 + $0x250] sm:$0xff]
    %v115 = vld [vmem:[#allocation2 + $0x258] sm:$0xff]
    %v116 = vld [vmem:[#allocation2 + $0x260] sm:$0xff]
    %v117 = vld [vmem:[#allocation2 + $0x268] sm:$0xff]
    %v118 = vld [vmem:[#allocation2 + $0x270] sm:$0xff]
    %v119 = vld [vmem:[#allocation2 + $0x278] sm:$0xff]
    %v120 = vld [vmem:[#allocation2 + $0x280] sm:$0xff]
    %v121 = vld [vmem:[#allocation2 + $0x288] sm:$0xff]
    %v122 = vld [vmem:[#allocation2 + $0x290] sm:$0xff]
    %v123 = vld [vmem:[#allocation2 + $0x298] sm:$0xff]
    %v124 = vld [vmem:[#allocation2 + $0x2a0] sm:$0xff]
    %v125 = vld [vmem:[#allocation2 + $0x2a8] sm:$0xff]
    %v126 = vld [vmem:[#allocation2 + $0x2b0] sm:$0xff]
    %v127 = vld [vmem:[#allocation2 + $0x2b8] sm:$0xff]
    %v128 = vld [vmem:[#allocation2 + $0x2c0] sm:$0xff]
    %v129 = vld [vmem:[#allocation2 + $0x2c8] sm:$0xff]
    %v130 = vld [vmem:[#allocation2 + $0x2d0] sm:$0xff]
    %v131 = vld [vmem:[#allocation2 + $0x2d8] sm:$0xff]
    %v132 = vld [vmem:[#allocation2 + $0x2e0] sm:$0xff]
    %v133 = vld [vmem:[#allocation2 + $0x2e8] sm:$0xff]
    %v134 = vld [vmem:[#allocation2 + $0x2f0] sm:$0xff]
    %v135 = vld [vmem:[#allocation2 + $0x2f8] sm:$0xff]
    %v136 = vld [vmem:[#allocation2 + $0x300] sm:$0xff]
    %v137 = vld [vmem:[#allocation2 + $0x308] sm:$0xff]
    %v138 = vld [vmem:[#allocation2 + $0x310] sm:$0xff]
    %v139 = vld [vmem:[#allocation2 + $0x318] sm:$0xff]
    %v140 = vld [vmem:[#allocation2 + $0x320] sm:$0xff]
    %v141 = vld [vmem:[#allocation2 + $0x328] sm:$0xff]
    %v142 = vld [vmem:[#allocation2 + $0x330] sm:$0xff]
    %v143 = vld [vmem:[#allocation2 + $0x338] sm:$0xff]
    %v144 = vld [vmem:[#allocation2 + $0x340] sm:$0xff]
    %v145 = vld [vmem:[#allocation2 + $0x348] sm:$0xff]
    %v146 = vld [vmem:[#allocation2 + $0x350] sm:$0xff]
    %v147 = vld [vmem:[#allocation2 + $0x358] sm:$0xff]
    %v148 = vld [vmem:[#allocation2 + $0x360] sm:$0xff]
    %v149 = vld [vmem:[#allocation2 + $0x368] sm:$0xff]
    %v150 = vld [vmem:[#allocation2 + $0x370] sm:$0xff]
    %v151 = vld [vmem:[#allocation2 + $0x378] sm:$0xff]
    %v152 = vld [vmem:[#allocation2 + $0x380] sm:$0xff]
    %v153 = vld [vmem:[#allocation2 + $0x388] sm:$0xff]
    %v154 = vld [vmem:[#allocation2 + $0x390] sm:$0xff]
    %v155 = vld [vmem:[#allocation2 + $0x398] sm:$0xff]
    %v156 = vld [vmem:[#allocation2 + $0x3a0] sm:$0xff]
    %v157 = vld [vmem:[#allocation2 + $0x3a8] sm:$0xff]
    %v158 = vld [vmem:[#allocation2 + $0x3b0] sm:$0xff]
    %v159 = vld [vmem:[#allocation2 + $0x3b8] sm:$0xff]
    %v160 = vld [vmem:[#allocation2 + $0x3c0] sm:$0xff]
    %v161 = vld [vmem:[#allocation2 + $0x3c8] sm:$0xff]
    %v162 = vld [vmem:[#allocation2 + $0x3d0] sm:$0xff]
    %v163 = vld [vmem:[#allocation2 + $0x3d8] sm:$0xff]
    %v164 = vld [vmem:[#allocation2 + $0x3e0] sm:$0xff]
    %v165 = vld [vmem:[#allocation2 + $0x3e8] sm:$0xff]
    %v166 = vld [vmem:[#allocation2 + $0x3f0] sm:$0xff]
    %v167 = vld [vmem:[#allocation2 + $0x3f8] sm:$0xff]
    %v168 = vld [vmem:[#allocation5] sm:$0xff]
    %v169 = vld [vmem:[#allocation5 + $0x8] sm:$0xff]
    %v170 = vld [vmem:[#allocation5 + $0x10] sm:$0xff]
    %v171 = vld [vmem:[#allocation5 + $0x18] sm:$0xff]
    %v172 = vld [vmem:[#allocation5 + $0x20] sm:$0xff]
    %v173 = vld [vmem:[#allocation5 + $0x28] sm:$0xff]
    %v174 = vld [vmem:[#allocation5 + $0x30] sm:$0xff]
    %v175 = vld [vmem:[#allocation5 + $0x38] sm:$0xff]
    %v176 = vld [vmem:[#allocation5 + $0x40] sm:$0xff]
    %v177 = vld [vmem:[#allocation5 + $0x48] sm:$0xff]
    %v178 = vld [vmem:[#allocation5 + $0x50] sm:$0xff]
    %v179 = vld [vmem:[#allocation5 + $0x58] sm:$0xff]
    %v180 = vld [vmem:[#allocation5 + $0x60] sm:$0xff]
    %v181 = vld [vmem:[#allocation5 + $0x68] sm:$0xff]
    %v182 = vld [vmem:[#allocation5 + $0x70] sm:$0xff]
    %v183 = vld [vmem:[#allocation5 + $0x78] sm:$0xff]
    %v184 = vld [vmem:[#allocation5 + $0x80] sm:$0xff]
    %v185 = vld [vmem:[#allocation5 + $0x88] sm:$0xff]
    %v186 = vld [vmem:[#allocation5 + $0x90] sm:$0xff]
    %v187 = vld [vmem:[#allocation5 + $0x98] sm:$0xff]
    %v188 = vld [vmem:[#allocation5 + $0xa0] sm:$0xff]
    %v189 = vld [vmem:[#allocation5 + $0xa8] sm:$0xff]
    %v190 = vld [vmem:[#allocation5 + $0xb0] sm:$0xff]
    %v191 = vld [vmem:[#allocation5 + $0xb8] sm:$0xff]
    %v192 = vld [vmem:[#allocation5 + $0xc0] sm:$0xff]
    %v193 = vld [vmem:[#allocation5 + $0xc8] sm:$0xff]
    %v194 = vld [vmem:[#allocation5 + $0xd0] sm:$0xff]
    %v195 = vld [vmem:[#allocation5 + $0xd8] sm:$0xff]
    %v196 = vld [vmem:[#allocation5 + $0xe0] sm:$0xff]
    %v197 = vld [vmem:[#allocation5 + $0xe8] sm:$0xff]
    %v198 = vld [vmem:[#allocation5 + $0xf0] sm:$0xff]
    %v199 = vld [vmem:[#allocation5 + $0xf8] sm:$0xff]
    %v200 = vld [vmem:[#allocation5 + $0x100] sm:$0xff]
    %v201 = vld [vmem:[#allocation5 + $0x108] sm:$0xff]
    %v202 = vld [vmem:[#allocation5 + $0x110] sm:$0xff]
    %v203 = vld [vmem:[#allocation5 + $0x118] sm:$0xff]
    %v204 = vld [vmem:[#allocation5 + $0x120] sm:$0xff]
    %v205 = vld [vmem:[#allocation5 + $0x128] sm:$0xff]
    %v206 = vld [vmem:[#allocation5 + $0x130] sm:$0xff]
    %v207 = vld [vmem:[#allocation5 + $0x138] sm:$0xff]
    %v208 = vld [vmem:[#allocation5 + $0x140] sm:$0xff]
    %v209 = vld [vmem:[#allocation5 + $0x148] sm:$0xff]
    %v210 = vld [vmem:[#allocation5 + $0x150] sm:$0xff]
    %v211 = vld [vmem:[#allocation5 + $0x158] sm:$0xff]
    %v212 = vld [vmem:[#allocation5 + $0x160] sm:$0xff]
    %v213 = vld [vmem:[#allocation5 + $0x168] sm:$0xff]
    %v214 = vld [vmem:[#allocation5 + $0x170] sm:$0xff]
    %v215 = vld [vmem:[#allocation5 + $0x178] sm:$0xff]
    %v216 = vld [vmem:[#allocation5 + $0x180] sm:$0xff]
    %v217 = vld [vmem:[#allocation5 + $0x188] sm:$0xff]
    %v218 = vld [vmem:[#allocation5 + $0x190] sm:$0xff]
    %v219 = vld [vmem:[#allocation5 + $0x198] sm:$0xff]
    %v220 = vld [vmem:[#allocation5 + $0x1a0] sm:$0xff]
    %v221 = vld [vmem:[#allocation5 + $0x1a8] sm:$0xff]
    %v222 = vld [vmem:[#allocation5 + $0x1b0] sm:$0xff]
    %v223 = vld [vmem:[#allocation5 + $0x1b8] sm:$0xff]
    %v224 = vld [vmem:[#allocation5 + $0x1c0] sm:$0xff]
    %v225 = vld [vmem:[#allocation5 + $0x1c8] sm:$0xff]
    %v226 = vld [vmem:[#allocation5 + $0x1d0] sm:$0xff]
    %v227 = vld [vmem:[#allocation5 + $0x1d8] sm:$0xff]
    %v228 = vld [vmem:[#allocation5 + $0x1e0] sm:$0xff]
    %v229 = vld [vmem:[#allocation5 + $0x1e8] sm:$0xff]
    %v230 = vld [vmem:[#allocation5 + $0x1f0] sm:$0xff]
    %v231 = vld [vmem:[#allocation5 + $0x1f8] sm:$0xff]
    %v232 = vld [vmem:[#allocation5 + $0x200] sm:$0xff]
    %v233 = vld [vmem:[#allocation5 + $0x208] sm:$0xff]
    %v234 = vld [vmem:[#allocation5 + $0x210] sm:$0xff]
    %v235 = vld [vmem:[#allocation5 + $0x218] sm:$0xff]
    %v236 = vld [vmem:[#allocation5 + $0x220] sm:$0xff]
    %v237 = vld [vmem:[#allocation5 + $0x228] sm:$0xff]
    %v238 = vld [vmem:[#allocation5 + $0x230] sm:$0xff]
    %v239 = vld [vmem:[#allocation5 + $0x238] sm:$0xff]
    %v240 = vld [vmem:[#allocation5 + $0x240] sm:$0xff]
    %v241 = vld [vmem:[#allocation5 + $0x248] sm:$0xff]
    %v242 = vld [vmem:[#allocation5 + $0x250] sm:$0xff]
    %v243 = vld [vmem:[#allocation5 + $0x258] sm:$0xff]
    %v244 = vld [vmem:[#allocation5 + $0x260] sm:$0xff]
    %v245 = vld [vmem:[#allocation5 + $0x268] sm:$0xff]
    %v246 = vld [vmem:[#allocation5 + $0x270] sm:$0xff]
    %v247 = vld [vmem:[#allocation5 + $0x278] sm:$0xff]
    %v248 = vld [vmem:[#allocation5 + $0x280] sm:$0xff]
    %v249 = vld [vmem:[#allocation5 + $0x288] sm:$0xff]
    %v250 = vld [vmem:[#allocation5 + $0x290] sm:$0xff]
    %v251 = vld [vmem:[#allocation5 + $0x298] sm:$0xff]
    %v252 = vld [vmem:[#allocation5 + $0x2a0] sm:$0xff]
    %v253 = vld [vmem:[#allocation5 + $0x2a8] sm:$0xff]
    %v254 = vld [vmem:[#allocation5 + $0x2b0] sm:$0xff]
    %v255 = vld [vmem:[#allocation5 + $0x2b8] sm:$0xff]
    %v256 = vld [vmem:[#allocation5 + $0x2c0] sm:$0xff]
    %v257 = vld [vmem:[#allocation5 + $0x2c8] sm:$0xff]
    %v258 = vld [vmem:[#allocation5 + $0x2d0] sm:$0xff]
    %v259 = vld [vmem:[#allocation5 + $0x2d8] sm:$0xff]
    %v260 = vld [vmem:[#allocation5 + $0x2e0] sm:$0xff]
    %v261 = vld [vmem:[#allocation5 + $0x2e8] sm:$0xff]
    %v262 = vld [vmem:[#allocation5 + $0x2f0] sm:$0xff]
    %v263 = vld [vmem:[#allocation5 + $0x2f8] sm:$0xff]
    %v264 = vld [vmem:[#allocation5 + $0x300] sm:$0xff]
    %v265 = vld [vmem:[#allocation5 + $0x308] sm:$0xff]
    %v266 = vld [vmem:[#allocation5 + $0x310] sm:$0xff]
    %v267 = vld [vmem:[#allocation5 + $0x318] sm:$0xff]
    %v268 = vld [vmem:[#allocation5 + $0x320] sm:$0xff]
    %v269 = vld [vmem:[#allocation5 + $0x328] sm:$0xff]
    %v270 = vld [vmem:[#allocation5 + $0x330] sm:$0xff]
    %v271 = vld [vmem:[#allocation5 + $0x338] sm:$0xff]
    %v272 = vld [vmem:[#allocation5 + $0x340] sm:$0xff]
    %v273 = vld [vmem:[#allocation5 + $0x348] sm:$0xff]
    %v274 = vld [vmem:[#allocation5 + $0x350] sm:$0xff]
    %v275 = vld [vmem:[#allocation5 + $0x358] sm:$0xff]
    %v276 = vld [vmem:[#allocation5 + $0x360] sm:$0xff]
    %v277 = vld [vmem:[#allocation5 + $0x368] sm:$0xff]
    %v278 = vld [vmem:[#allocation5 + $0x370] sm:$0xff]
    %v279 = vld [vmem:[#allocation5 + $0x378] sm:$0xff]
    %v280 = vld [vmem:[#allocation5 + $0x380] sm:$0xff]
    %v281 = vld [vmem:[#allocation5 + $0x388] sm:$0xff]
    %v282 = vld [vmem:[#allocation5 + $0x390] sm:$0xff]
    %v283 = vld [vmem:[#allocation5 + $0x398] sm:$0xff]
    %v284 = vld [vmem:[#allocation5 + $0x3a0] sm:$0xff]
    %v285 = vld [vmem:[#allocation5 + $0x3a8] sm:$0xff]
    %v286 = vld [vmem:[#allocation5 + $0x3b0] sm:$0xff]
    %v287 = vld [vmem:[#allocation5 + $0x3b8] sm:$0xff]
    %v288 = vld [vmem:[#allocation5 + $0x3c0] sm:$0xff]
    %v289 = vld [vmem:[#allocation5 + $0x3c8] sm:$0xff]
    %v290 = vld [vmem:[#allocation5 + $0x3d0] sm:$0xff]
    %v291 = vld [vmem:[#allocation5 + $0x3d8] sm:$0xff]
    %v292 = vld [vmem:[#allocation5 + $0x3e0] sm:$0xff]
    %v293 = vld [vmem:[#allocation5 + $0x3e8] sm:$0xff]
    %v294 = vld [vmem:[#allocation5 + $0x3f0] sm:$0xff]
    %v295 = vld [vmem:[#allocation5 + $0x3f8] sm:$0xff]
    %v296 = vsub.f32 %v40, %v168
    %v297 = vsub.f32 %v41, %v169
    %v298 = vsub.f32 %v42, %v170
    %v299 = vsub.f32 %v43, %v171
    %v300 = vsub.f32 %v44, %v172
    %v301 = vsub.f32 %v45, %v173
    %v302 = vsub.f32 %v46, %v174
    %v303 = vsub.f32 %v47, %v175
    %v304 = vsub.f32 %v48, %v176
    %v305 = vsub.f32 %v49, %v177
    %v306 = vsub.f32 %v50, %v178
    %v307 = vsub.f32 %v51, %v179
    %v308 = vsub.f32 %v52, %v180
    %v309 = vsub.f32 %v53, %v181
    %v310 = vsub.f32 %v54, %v182
    %v311 = vsub.f32 %v55, %v183
    %v312 = vsub.f32 %v56, %v184
    %v313 = vsub.f32 %v57, %v185
    %v314 = vsub.f32 %v58, %v186
    %v315 = vsub.f32 %v59, %v187
    %v316 = vsub.f32 %v60, %v188
    %v317 = vsub.f32 %v61, %v189
    %v318 = vsub.f32 %v62, %v190
    %v319 = vsub.f32 %v63, %v191
    %v320 = vsub.f32 %v64, %v192
    %v321 = vsub.f32 %v65, %v193
    %v322 = vsub.f32 %v66, %v194
    %v323 = vsub.f32 %v67, %v195
    %v324 = vsub.f32 %v68, %v196
    %v325 = vsub.f32 %v69, %v197
    %v326 = vsub.f32 %v70, %v198
    %v327 = vsub.f32 %v71, %v199
    %v328 = vsub.f32 %v72, %v200
    %v329 = vsub.f32 %v73, %v201
    %v330 = vsub.f32 %v74, %v202
    %v331 = vsub.f32 %v75, %v203
    %v332 = vsub.f32 %v76, %v204
    %v333 = vsub.f32 %v77, %v205
    %v334 = vsub.f32 %v78, %v206
    %v335 = vsub.f32 %v79, %v207
    %v336 = vsub.f32 %v80, %v208
    %v337 = vsub.f32 %v81, %v209
    %v338 = vsub.f32 %v82, %v210
    %v339 = vsub.f32 %v83, %v211
    %v340 = vsub.f32 %v84, %v212
    %v341 = vsub.f32 %v85, %v213
    %v342 = vsub.f32 %v86, %v214
    %v343 = vsub.f32 %v87, %v215
    %v344 = vsub.f32 %v88, %v216
    %v345 = vsub.f32 %v89, %v217
    %v346 = vsub.f32 %v90, %v218
    %v347 = vsub.f32 %v91, %v219
    %v348 = vsub.f32 %v92, %v220
    %v349 = vsub.f32 %v93, %v221
    %v350 = vsub.f32 %v94, %v222
    %v351 = vsub.f32 %v95, %v223
    %v352 = vsub.f32 %v96, %v224
    %v353 = vsub.f32 %v97, %v225
    %v354 = vsub.f32 %v98, %v226
    %v355 = vsub.f32 %v99, %v227
    %v356 = vsub.f32 %v100, %v228
    %v357 = vsub.f32 %v101, %v229
    %v358 = vsub.f32 %v102, %v230
    %v359 = vsub.f32 %v103, %v231
    %v360 = vsub.f32 %v104, %v232
    %v361 = vsub.f32 %v105, %v233
    %v362 = vsub.f32 %v106, %v234
    %v363 = vsub.f32 %v107, %v235
    %v364 = vsub.f32 %v108, %v236
    %v365 = vsub.f32 %v109, %v237
    %v366 = vsub.f32 %v110, %v238
    %v367 = vsub.f32 %v111, %v239
    %v368 = vsub.f32 %v112, %v240
    %v369 = vsub.f32 %v113, %v241
    %v370 = vsub.f32 %v114, %v242
    %v371 = vsub.f32 %v115, %v243
    %v372 = vsub.f32 %v116, %v244
    %v373 = vsub.f32 %v117, %v245
    %v374 = vsub.f32 %v118, %v246
    %v375 = vsub.f32 %v119, %v247
    %v376 = vsub.f32 %v120, %v248
    %v377 = vsub.f32 %v121, %v249
    %v378 = vsub.f32 %v122, %v250
    %v379 = vsub.f32 %v123, %v251
    %v380 = vsub.f32 %v124, %v252
    %v381 = vsub.f32 %v125, %v253
    %v382 = vsub.f32 %v126, %v254
    %v383 = vsub.f32 %v127, %v255
    %v384 = vsub.f32 %v128, %v256
    %v385 = vsub.f32 %v129, %v257
    %v386 = vsub.f32 %v130, %v258
    %v387 = vsub.f32 %v131, %v259
    %v388 = vsub.f32 %v132, %v260
    %v389 = vsub.f32 %v133, %v261
    %v390 = vsub.f32 %v134, %v262
    %v391 = vsub.f32 %v135, %v263
    %v392 = vsub.f32 %v136, %v264
    %v393 = vsub.f32 %v137, %v265
    %v394 = vsub.f32 %v138, %v266
    %v395 = vsub.f32 %v139, %v267
    %v396 = vsub.f32 %v140, %v268
    %v397 = vsub.f32 %v141, %v269
    %v398 = vsub.f32 %v142, %v270
    %v399 = vsub.f32 %v143, %v271
    %v400 = vsub.f32 %v144, %v272
    %v401 = vsub.f32 %v145, %v273
    %v402 = vsub.f32 %v146, %v274
    %v403 = vsub.f32 %v147, %v275
    %v404 = vsub.f32 %v148, %v276
    %v405 = vsub.f32 %v149, %v277
    %v406 = vsub.f32 %v150, %v278
    %v407 = vsub.f32 %v151, %v279
    %v408 = vsub.f32 %v152, %v280
    %v409 = vsub.f32 %v153, %v281
    %v410 = vsub.f32 %v154, %v282
    %v411 = vsub.f32 %v155, %v283
    %v412 = vsub.f32 %v156, %v284
    %v413 = vsub.f32 %v157, %v285
    %v414 = vsub.f32 %v158, %v286
    %v415 = vsub.f32 %v159, %v287
    %v416 = vsub.f32 %v160, %v288
    %v417 = vsub.f32 %v161, %v289
    %v418 = vsub.f32 %v162, %v290
    %v419 = vsub.f32 %v163, %v291
    %v420 = vsub.f32 %v164, %v292
    %v421 = vsub.f32 %v165, %v293
    %v422 = vsub.f32 %v166, %v294
    %v423 = vsub.f32 %v167, %v295
    %v424 = vand.u32 2147483647, %v296
    %v425 = vand.u32 2147483647, %v297
    %v426 = vand.u32 2147483647, %v298
    %v427 = vand.u32 2147483647, %v299
    %v428 = vand.u32 2147483647, %v300
    %v429 = vand.u32 2147483647, %v301
    %v430 = vand.u32 2147483647, %v302
    %v431 = vand.u32 2147483647, %v303
    %v432 = vand.u32 2147483647, %v304
    %v433 = vand.u32 2147483647, %v305
    %v434 = vand.u32 2147483647, %v306
    %v435 = vand.u32 2147483647, %v307
    %v436 = vand.u32 2147483647, %v308
    %v437 = vand.u32 2147483647, %v309
    %v438 = vand.u32 2147483647, %v310
    %v439 = vand.u32 2147483647, %v311
    %v440 = vand.u32 2147483647, %v312
    %v441 = vand.u32 2147483647, %v313
    %v442 = vand.u32 2147483647, %v314
    %v443 = vand.u32 2147483647, %v315
    %v444 = vand.u32 2147483647, %v316
    %v445 = vand.u32 2147483647, %v317
    %v446 = vand.u32 2147483647, %v318
    %v447 = vand.u32 2147483647, %v319
    %v448 = vand.u32 2147483647, %v320
    %v449 = vand.u32 2147483647, %v321
    %v450 = vand.u32 2147483647, %v322
    %v451 = vand.u32 2147483647, %v323
    %v452 = vand.u32 2147483647, %v324
    %v453 = vand.u32 2147483647, %v325
    %v454 = vand.u32 2147483647, %v326
    %v455 = vand.u32 2147483647, %v327
    %v456 = vand.u32 2147483647, %v328
    %v457 = vand.u32 2147483647, %v329
    %v458 = vand.u32 2147483647, %v330
    %v459 = vand.u32 2147483647, %v331
    %v460 = vand.u32 2147483647, %v332
    %v461 = vand.u32 2147483647, %v333
    %v462 = vand.u32 2147483647, %v334
    %v463 = vand.u32 2147483647, %v335
    %v464 = vand.u32 2147483647, %v336
    %v465 = vand.u32 2147483647, %v337
    %v466 = vand.u32 2147483647, %v338
    %v467 = vand.u32 2147483647, %v339
    %v468 = vand.u32 2147483647, %v340
    %v469 = vand.u32 2147483647, %v341
    %v470 = vand.u32 2147483647, %v342
    %v471 = vand.u32 2147483647, %v343
    %v472 = vand.u32 2147483647, %v344
    %v473 = vand.u32 2147483647, %v345
    %v474 = vand.u32 2147483647, %v346
    %v475 = vand.u32 2147483647, %v347
    %v476 = vand.u32 2147483647, %v348
    %v477 = vand.u32 2147483647, %v349
    %v478 = vand.u32 2147483647, %v350
    %v479 = vand.u32 2147483647, %v351
    %v480 = vand.u32 2147483647, %v352
    %v481 = vand.u32 2147483647, %v353
    %v482 = vand.u32 2147483647, %v354
    %v483 = vand.u32 2147483647, %v355
    %v484 = vand.u32 2147483647, %v356
    %v485 = vand.u32 2147483647, %v357
    %v486 = vand.u32 2147483647, %v358
    %v487 = vand.u32 2147483647, %v359
    %v488 = vand.u32 2147483647, %v360
    %v489 = vand.u32 2147483647, %v361
    %v490 = vand.u32 2147483647, %v362
    %v491 = vand.u32 2147483647, %v363
    %v492 = vand.u32 2147483647, %v364
    %v493 = vand.u32 2147483647, %v365
    %v494 = vand.u32 2147483647, %v366
    %v495 = vand.u32 2147483647, %v367
    %v496 = vand.u32 2147483647, %v368
    %v497 = vand.u32 2147483647, %v369
    %v498 = vand.u32 2147483647, %v370
    %v499 = vand.u32 2147483647, %v371
    %v500 = vand.u32 2147483647, %v372
    %v501 = vand.u32 2147483647, %v373
    %v502 = vand.u32 2147483647, %v374
    %v503 = vand.u32 2147483647, %v375
    %v504 = vand.u32 2147483647, %v376
    %v505 = vand.u32 2147483647, %v377
    %v506 = vand.u32 2147483647, %v378
    %v507 = vand.u32 2147483647, %v379
    %v508 = vand.u32 2147483647, %v380
    %v509 = vand.u32 2147483647, %v381
    %v510 = vand.u32 2147483647, %v382
    %v511 = vand.u32 2147483647, %v383
    %v512 = vand.u32 2147483647, %v384
    %v513 = vand.u32 2147483647, %v385
    %v514 = vand.u32 2147483647, %v386
    %v515 = vand.u32 2147483647, %v387
    %v516 = vand.u32 2147483647, %v388
    %v517 = vand.u32 2147483647, %v389
    %v518 = vand.u32 2147483647, %v390
    %v519 = vand.u32 2147483647, %v391
    %v520 = vand.u32 2147483647, %v392
    %v521 = vand.u32 2147483647, %v393
    %v522 = vand.u32 2147483647, %v394
    %v523 = vand.u32 2147483647, %v395
    %v524 = vand.u32 2147483647, %v396
    %v525 = vand.u32 2147483647, %v397
    %v526 = vand.u32 2147483647, %v398
    %v527 = vand.u32 2147483647, %v399
    %v528 = vand.u32 2147483647, %v400
    %v529 = vand.u32 2147483647, %v401
    %v530 = vand.u32 2147483647, %v402
    %v531 = vand.u32 2147483647, %v403
    %v532 = vand.u32 2147483647, %v404
    %v533 = vand.u32 2147483647, %v405
    %v534 = vand.u32 2147483647, %v406
    %v535 = vand.u32 2147483647, %v407
    %v536 = vand.u32 2147483647, %v408
    %v537 = vand.u32 2147483647, %v409
    %v538 = vand.u32 2147483647, %v410
    %v539 = vand.u32 2147483647, %v411
    %v540 = vand.u32 2147483647, %v412
    %v541 = vand.u32 2147483647, %v413
    %v542 = vand.u32 2147483647, %v414
    %v543 = vand.u32 2147483647, %v415
    %v544 = vand.u32 2147483647, %v416
    %v545 = vand.u32 2147483647, %v417
    %v546 = vand.u32 2147483647, %v418
    %v547 = vand.u32 2147483647, %v419
    %v548 = vand.u32 2147483647, %v420
    %v549 = vand.u32 2147483647, %v421
    %v550 = vand.u32 2147483647, %v422
    %v551 = vand.u32 2147483647, %v423
    %552 = vst [vmem:[#allocation7] sm:$0xff] %v424
    %553 = vst [vmem:[#allocation7 + $0x8] sm:$0xff] %v425
    %554 = vst [vmem:[#allocation7 + $0x10] sm:$0xff] %v426
    %555 = vst [vmem:[#allocation7 + $0x18] sm:$0xff] %v427
    %556 = vst [vmem:[#allocation7 + $0x20] sm:$0xff] %v428
    %557 = vst [vmem:[#allocation7 + $0x28] sm:$0xff] %v429
    %558 = vst [vmem:[#allocation7 + $0x30] sm:$0xff] %v430
    %559 = vst [vmem:[#allocation7 + $0x38] sm:$0xff] %v431
    %560 = vst [vmem:[#allocation7 + $0x40] sm:$0xff] %v432
    %561 = vst [vmem:[#allocation7 + $0x48] sm:$0xff] %v433
    %562 = vst [vmem:[#allocation7 + $0x50] sm:$0xff] %v434
    %563 = vst [vmem:[#allocation7 + $0x58] sm:$0xff] %v435
    %564 = vst [vmem:[#allocation7 + $0x60] sm:$0xff] %v436
    %565 = vst [vmem:[#allocation7 + $0x68] sm:$0xff] %v437
    %566 = vst [vmem:[#allocation7 + $0x70] sm:$0xff] %v438
    %567 = vst [vmem:[#allocation7 + $0x78] sm:$0xff] %v439
    %568 = vst [vmem:[#allocation7 + $0x80] sm:$0xff] %v440
    %569 = vst [vmem:[#allocation7 + $0x88] sm:$0xff] %v441
    %570 = vst [vmem:[#allocation7 + $0x90] sm:$0xff] %v442
    %571 = vst [vmem:[#allocation7 + $0x98] sm:$0xff] %v443
    %572 = vst [vmem:[#allocation7 + $0xa0] sm:$0xff] %v444
    %573 = vst [vmem:[#allocation7 + $0xa8] sm:$0xff] %v445
    %574 = vst [vmem:[#allocation7 + $0xb0] sm:$0xff] %v446
    %575 = vst [vmem:[#allocation7 + $0xb8] sm:$0xff] %v447
    %576 = vst [vmem:[#allocation7 + $0xc0] sm:$0xff] %v448
    %577 = vst [vmem:[#allocation7 + $0xc8] sm:$0xff] %v449
    %578 = vst [vmem:[#allocation7 + $0xd0] sm:$0xff] %v450
    %579 = vst [vmem:[#allocation7 + $0xd8] sm:$0xff] %v451
    %580 = vst [vmem:[#allocation7 + $0xe0] sm:$0xff] %v452
    %581 = vst [vmem:[#allocation7 + $0xe8] sm:$0xff] %v453
    %582 = vst [vmem:[#allocation7 + $0xf0] sm:$0xff] %v454
    %583 = vst [vmem:[#allocation7 + $0xf8] sm:$0xff] %v455
    %584 = vst [vmem:[#allocation7 + $0x100] sm:$0xff] %v456
    %585 = vst [vmem:[#allocation7 + $0x108] sm:$0xff] %v457
    %586 = vst [vmem:[#allocation7 + $0x110] sm:$0xff] %v458
    %587 = vst [vmem:[#allocation7 + $0x118] sm:$0xff] %v459
    %588 = vst [vmem:[#allocation7 + $0x120] sm:$0xff] %v460
    %589 = vst [vmem:[#allocation7 + $0x128] sm:$0xff] %v461
    %590 = vst [vmem:[#allocation7 + $0x130] sm:$0xff] %v462
    %591 = vst [vmem:[#allocation7 + $0x138] sm:$0xff] %v463
    %592 = vst [vmem:[#allocation7 + $0x140] sm:$0xff] %v464
    %593 = vst [vmem:[#allocation7 + $0x148] sm:$0xff] %v465
    %594 = vst [vmem:[#allocation7 + $0x150] sm:$0xff] %v466
    %595 = vst [vmem:[#allocation7 + $0x158] sm:$0xff] %v467
    %596 = vst [vmem:[#allocation7 + $0x160] sm:$0xff] %v468
    %597 = vst [vmem:[#allocation7 + $0x168] sm:$0xff] %v469
    %598 = vst [vmem:[#allocation7 + $0x170] sm:$0xff] %v470
    %599 = vst [vmem:[#allocation7 + $0x178] sm:$0xff] %v471
    %600 = vst [vmem:[#allocation7 + $0x180] sm:$0xff] %v472
    %601 = vst [vmem:[#allocation7 + $0x188] sm:$0xff] %v473
    %602 = vst [vmem:[#allocation7 + $0x190] sm:$0xff] %v474
    %603 = vst [vmem:[#allocation7 + $0x198] sm:$0xff] %v475
    %604 = vst [vmem:[#allocation7 + $0x1a0] sm:$0xff] %v476
    %605 = vst [vmem:[#allocation7 + $0x1a8] sm:$0xff] %v477
    %606 = vst [vmem:[#allocation7 + $0x1b0] sm:$0xff] %v478
    %607 = vst [vmem:[#allocation7 + $0x1b8] sm:$0xff] %v479
    %608 = vst [vmem:[#allocation7 + $0x1c0] sm:$0xff] %v480
    %609 = vst [vmem:[#allocation7 + $0x1c8] sm:$0xff] %v481
    %610 = vst [vmem:[#allocation7 + $0x1d0] sm:$0xff] %v482
    %611 = vst [vmem:[#allocation7 + $0x1d8] sm:$0xff] %v483
    %612 = vst [vmem:[#allocation7 + $0x1e0] sm:$0xff] %v484
    %613 = vst [vmem:[#allocation7 + $0x1e8] sm:$0xff] %v485
    %614 = vst [vmem:[#allocation7 + $0x1f0] sm:$0xff] %v486
    %615 = vst [vmem:[#allocation7 + $0x1f8] sm:$0xff] %v487
    %616 = vst [vmem:[#allocation7 + $0x200] sm:$0xff] %v488
    %617 = vst [vmem:[#allocation7 + $0x208] sm:$0xff] %v489
    %618 = vst [vmem:[#allocation7 + $0x210] sm:$0xff] %v490
    %619 = vst [vmem:[#allocation7 + $0x218] sm:$0xff] %v491
    %620 = vst [vmem:[#allocation7 + $0x220] sm:$0xff] %v492
    %621 = vst [vmem:[#allocation7 + $0x228] sm:$0xff] %v493
    %622 = vst [vmem:[#allocation7 + $0x230] sm:$0xff] %v494
    %623 = vst [vmem:[#allocation7 + $0x238] sm:$0xff] %v495
    %624 = vst [vmem:[#allocation7 + $0x240] sm:$0xff] %v496
    %625 = vst [vmem:[#allocation7 + $0x248] sm:$0xff] %v497
    %626 = vst [vmem:[#allocation7 + $0x250] sm:$0xff] %v498
    %627 = vst [vmem:[#allocation7 + $0x258] sm:$0xff] %v499
    %628 = vst [vmem:[#allocation7 + $0x260] sm:$0xff] %v500
    %629 = vst [vmem:[#allocation7 + $0x268] sm:$0xff] %v501
    %630 = vst [vmem:[#allocation7 + $0x270] sm:$0xff] %v502
    %631 = vst [vmem:[#allocation7 + $0x278] sm:$0xff] %v503
    %632 = vst [vmem:[#allocation7 + $0x280] sm:$0xff] %v504
    %633 = vst [vmem:[#allocation7 + $0x288] sm:$0xff] %v505
    %634 = vst [vmem:[#allocation7 + $0x290] sm:$0xff] %v506
    %635 = vst [vmem:[#allocation7 + $0x298] sm:$0xff] %v507
    %636 = vst [vmem:[#allocation7 + $0x2a0] sm:$0xff] %v508
    %637 = vst [vmem:[#allocation7 + $0x2a8] sm:$0xff] %v509
    %638 = vst [vmem:[#allocation7 + $0x2b0] sm:$0xff] %v510
    %639 = vst [vmem:[#allocation7 + $0x2b8] sm:$0xff] %v511
    %640 = vst [vmem:[#allocation7 + $0x2c0] sm:$0xff] %v512
    %641 = vst [vmem:[#allocation7 + $0x2c8] sm:$0xff] %v513
    %642 = vst [vmem:[#allocation7 + $0x2d0] sm:$0xff] %v514
    %643 = vst [vmem:[#allocation7 + $0x2d8] sm:$0xff] %v515
    %644 = vst [vmem:[#allocation7 + $0x2e0] sm:$0xff] %v516
    %645 = vst [vmem:[#allocation7 + $0x2e8] sm:$0xff] %v517
    %646 = vst [vmem:[#allocation7 + $0x2f0] sm:$0xff] %v518
    %647 = vst [vmem:[#allocation7 + $0x2f8] sm:$0xff] %v519
    %648 = vst [vmem:[#allocation7 + $0x300] sm:$0xff] %v520
    %649 = vst [vmem:[#allocation7 + $0x308] sm:$0xff] %v521
    %650 = vst [vmem:[#allocation7 + $0x310] sm:$0xff] %v522
    %651 = vst [vmem:[#allocation7 + $0x318] sm:$0xff] %v523
    %652 = vst [vmem:[#allocation7 + $0x320] sm:$0xff] %v524
    %653 = vst [vmem:[#allocation7 + $0x328] sm:$0xff] %v525
    %654 = vst [vmem:[#allocation7 + $0x330] sm:$0xff] %v526
    %655 = vst [vmem:[#allocation7 + $0x338] sm:$0xff] %v527
    %656 = vst [vmem:[#allocation7 + $0x340] sm:$0xff] %v528
    %657 = vst [vmem:[#allocation7 + $0x348] sm:$0xff] %v529
    %658 = vst [vmem:[#allocation7 + $0x350] sm:$0xff] %v530
    %659 = vst [vmem:[#allocation7 + $0x358] sm:$0xff] %v531
    %660 = vst [vmem:[#allocation7 + $0x360] sm:$0xff] %v532
    %661 = vst [vmem:[#allocation7 + $0x368] sm:$0xff] %v533
    %662 = vst [vmem:[#allocation7 + $0x370] sm:$0xff] %v534
    %663 = vst [vmem:[#allocation7 + $0x378] sm:$0xff] %v535
    %664 = vst [vmem:[#allocation7 + $0x380] sm:$0xff] %v536
    %665 = vst [vmem:[#allocation7 + $0x388] sm:$0xff] %v537
    %666 = vst [vmem:[#allocation7 + $0x390] sm:$0xff] %v538
    %667 = vst [vmem:[#allocation7 + $0x398] sm:$0xff] %v539
    %668 = vst [vmem:[#allocation7 + $0x3a0] sm:$0xff] %v540
    %669 = vst [vmem:[#allocation7 + $0x3a8] sm:$0xff] %v541
    %670 = vst [vmem:[#allocation7 + $0x3b0] sm:$0xff] %v542
    %671 = vst [vmem:[#allocation7 + $0x3b8] sm:$0xff] %v543
    %672 = vst [vmem:[#allocation7 + $0x3c0] sm:$0xff] %v544
    %673 = vst [vmem:[#allocation7 + $0x3c8] sm:$0xff] %v545
    %674 = vst [vmem:[#allocation7 + $0x3d0] sm:$0xff] %v546
    %675 = vst [vmem:[#allocation7 + $0x3d8] sm:$0xff] %v547
    %676 = vst [vmem:[#allocation7 + $0x3e0] sm:$0xff] %v548
    %677 = vst [vmem:[#allocation7 + $0x3e8] sm:$0xff] %v549
    %678 = vst [vmem:[#allocation7 + $0x3f0] sm:$0xff] %v550
    %679 = vst [vmem:[#allocation7 + $0x3f8] sm:$0xff] %v551
    // Predicated region
    $region18: #{tpu_custom_call.1} parent=1 // pred_check
      _
    $region19: #{tpu_custom_call.1} parent=1 // pred_check_branch
      %681 = sbr.rel (0) target = $region21
    $region20: #{tpu_custom_call.1} parent=1 // pred_region
      %s683 = ssub.s32 16384, 16384
      %684 = vsyncadd [#allocation4], %s683
      %s685 = sshll.u32 [#allocation7], 4
      %s686 = int_to_ptr.vmem [resolvable:$true] %s685
      %691 = dma.vmem_to_hbm [thread:$0]  %s686, 16384, %s2, [#allocation4], 256, 256, 16
    $region21: #{tpu_custom_call.1} parent=1 // pred_fallthru
      _
    // Predicated region
    $region22: #{tpu_custom_call.1} parent=1 // pred_check
      _
    $region23: #{tpu_custom_call.1} parent=1 // pred_check_branch
      %693 = sbr.rel (0) target = $region25
    $region24: #{tpu_custom_call.1} parent=1 // pred_region
      %694 = dma.done [#allocation4], 16384
    $region25: #{tpu_custom_call.1} parent=1 // pred_fallthru
      _
    %695 = vsyncpa [#allocation3], 1
    %696 = vsyncpa [#allocation6], 1
    %697 = vsyncpa [#allocation4], 1

</llo_original>
